<compile_context>
chip_gen: v7x
topology: tpu7x:2x2x1
jax: 0.10.0
libtpu: 0.0.40
codegen_flags: <defaults>
</compile_context>

<pallas_src>
import functools

import jax
import jax.numpy as jnp
from jax.experimental import pallas as pl
from jax.experimental.pallas import tpu as pltpu

PAD = 128  # lane-padded feature width for every layer


# ------------------------------------------------------------------ kernels ---

def gcn3_fused_kernel(p_ref, inv_ref, x_ref, w1_ref, b1_ref, w2_ref, b2_ref,
                      w3_ref, b3_ref, wc_ref, bc_ref, out_ref):
    """Whole GCN3 forward with the propagation matrix P resident in VMEM.

    P (bf16) is DMA'd from HBM exactly once and reused for all three
    propagation layers; activations are kept in bf16 between MXU calls with
    f32 accumulation everywhere.
    """
    p = p_ref[...]          # (npad, npad) bf16
    inv = inv_ref[...]      # (npad, 1)    f32

    def layer(h_bf16, w, b, mean):
        agg = jnp.dot(p, h_bf16, preferred_element_type=jnp.float32)
        if mean:                                   # mean = sum * 1/count (VPU)
            agg = agg * inv
        z = jnp.dot(agg.astype(jnp.bfloat16), w,
                    preferred_element_type=jnp.float32) + b
        return jnp.tanh(z).astype(jnp.bfloat16)

    h = layer(x_ref[...], w1_ref[...], b1_ref[...], mean=True)    # conv1
    h = layer(h, w2_ref[...], b2_ref[...], mean=True)             # conv2
    h = layer(h, w3_ref[...], b3_ref[...], mean=False)            # conv3 (add)
    out_ref[...] = (jnp.dot(h, wc_ref[...], preferred_element_type=jnp.float32)
                    + bc_ref[...])                                 # classifier


def gcn_mean_layer_kernel(p_ref, scale_ref, h_ref, w_ref, b_ref, out_ref):
    """One GCNConv(aggr='mean') layer for a tile of output rows (bf16 in/out)."""
    agg = jnp.dot(p_ref[...], h_ref[...], preferred_element_type=jnp.float32)
    agg = (agg * scale_ref[...]).astype(jnp.bfloat16)
    out_ref[...] = jnp.tanh(
        jnp.dot(agg, w_ref[...], preferred_element_type=jnp.float32) + b_ref[...]
    ).astype(out_ref.dtype)


def gcn_final_kernel(p_ref, h_ref, w3_ref, b3_ref, wc_ref, bc_ref, out_ref):
    """conv3 (aggr='add') + Linear classifier, fused, for a tile of rows."""
    agg = jnp.dot(p_ref[...], h_ref[...], preferred_element_type=jnp.float32)
    h3 = jnp.tanh(
        jnp.dot(agg.astype(jnp.bfloat16), w3_ref[...],
                preferred_element_type=jnp.float32) + b3_ref[...])
    out_ref[...] = (jnp.dot(h3.astype(jnp.bfloat16), wc_ref[...],
                            preferred_element_type=jnp.float32) + bc_ref[...])


# ------------------------------------------------------------------ helpers ---

def _round_up(x, m):
    return (x + m - 1) // m * m


def _vmem_budget():
    """Generation-aware usable-VMEM budget: ~75% of physical, >=16 MiB headroom."""
    cap = 64 << 20                                   # conservative fallback (v7x TC)
    try:
        info = pltpu.get_tpu_info()
        cap = int(getattr(info, "vmem_capacity_bytes", cap))
    except Exception:
        pass
    return max(min(int(0.75 * cap), cap - (16 << 20)), 16 << 20)


def _fused_footprint(npad):
    """VMEM bytes needed to keep P + activations resident for the fused kernel."""
    return (npad * npad * 2            # bf16 P (resident once)
            + npad * 4                 # f32 inv-count
            + npad * PAD * 2           # bf16 X
            + npad * PAD * 4           # f32 output
            + 4 * PAD * PAD * 2        # bf16 weights
            + 4 * PAD * 4              # f32 biases
            + 3 * npad * PAD * 4)      # live f32 intermediates headroom


def _tiling(n, budget):
    """Pick (row tile TM, padded N) for the row-tiled per-layer path.

    Streamed operands (P row tile, inv-count tile, output tile) are counted
    double-buffered; the resident bf16 H and the weights single-buffered.
    """
    def resident(npad):
        return (npad * PAD * 2         # bf16 resident H
                + 2 * PAD * PAD * 2    # bf16 layer W + classifier W
                + 2 * PAD * 4)         # f32 biases

    tm = 8
    for cand in (512, 256, 128, 64, 32, 16, 8):
        tm = cand
        npad = _round_up(max(n, tm), tm)
        streamed = 2 * (tm * npad * 2 + tm * 4 + tm * PAD * 4)
        if streamed + resident(npad) + (2 << 20) <= budget:
            break
    npad = _round_up(max(n, tm), tm)
    # v7x megacore: prefer >=2 row tiles when it costs (almost) nothing.
    while tm > 128 and npad // tm < 2:
        tm //= 2
        npad = _round_up(max(n, tm), tm)
    return tm, npad


def _pad2(a, rows, cols):
    out = jnp.zeros((rows, cols), jnp.float32)
    return out.at[:a.shape[0], :a.shape[1]].set(a.astype(jnp.float32))


def build_propagation(edge_index, num_nodes, npad):
    """bf16 P_sum [npad, npad] + f32 inv-count [npad, 1] (padded region inert).

    P_sum[i, j] = A_hat[i, j] * deg[i]^-1/2 * deg[j]^-1/2    (aggr='add')
    mean layers = (P_sum @ H) * inv_cnt                       (aggr='mean')
    """
    src, dst = edge_index[0], edge_index[1]
    loops = jnp.arange(num_nodes, dtype=edge_index.dtype)
    src = jnp.concatenate([src, loops])
    dst = jnp.concatenate([dst, loops])
    a_hat = jnp.zeros((num_nodes, num_nodes), jnp.float32).at[dst, src].add(1.0)
    deg = a_hat.sum(axis=1)                           # in-degree incl. self-loop
    dinv = jnp.where(deg > 0, 1.0 / jnp.sqrt(deg), 0.0)
    p_sum = a_hat * dinv[:, None] * dinv[None, :]
    inv_cnt = jnp.where(deg > 0, 1.0 / deg, 1.0)

    p_pad = jnp.zeros((npad, npad), jnp.float32).at[:num_nodes, :num_nodes].set(p_sum)
    inv_pad = jnp.ones((npad, 1), jnp.float32).at[:num_nodes, 0].set(inv_cnt)
    return p_pad.astype(jnp.bfloat16), inv_pad


def gcn3_prepare(edge_index, num_nodes, force_tiled=False):
    """Hoisted per-graph precompute: propagation matrix + launch configuration."""
    budget = _vmem_budget()
    npad_fused = _round_up(max(num_nodes, 8), 128)
    fused = (not force_tiled) and (_fused_footprint(npad_fused) <= budget)
    if fused:
        tm, npad = 0, npad_fused
    else:
        tm, npad = _tiling(num_nodes, budget)
    p_sum, inv_cnt = build_propagation(edge_index, num_nodes, npad)
    return p_sum, inv_cnt, dict(tm=tm, fused=fused, vmem_limit=budget)


# ------------------------------------------------------------- pallas calls ---

def _fused_call(p_sum, inv_cnt, xp, w1, b1, w2, b2, w3, b3, wc, bc, *, vmem_limit):
    npad = p_sum.shape[0]
    return pl.pallas_call(
        gcn3_fused_kernel,
        out_shape=jax.ShapeDtypeStruct((npad, PAD), jnp.float32),
        compiler_params=pltpu.CompilerParams(vmem_limit_bytes=vmem_limit),
    )(p_sum, inv_cnt, xp, w1, b1, w2, b2, w3, b3, wc, bc)


def _layer_call(p_sum, inv_cnt, h, w, b, *, tm, vmem_limit):
    npad = p_sum.shape[0]
    return pl.pallas_call(
        gcn_mean_layer_kernel,
        out_shape=jax.ShapeDtypeStruct((npad, PAD), jnp.bfloat16),
        grid=(npad // tm,),
        in_specs=[
            pl.BlockSpec((tm, npad), lambda i: (i, 0)),    # streamed P row tile (bf16)
            pl.BlockSpec((tm, 1), lambda i: (i, 0)),       # inv-count row tile
            pl.BlockSpec((npad, PAD), lambda i: (0, 0)),   # resident node features (bf16)
            pl.BlockSpec((PAD, PAD), lambda i: (0, 0)),    # W (bf16)
            pl.BlockSpec((1, PAD), lambda i: (0, 0)),      # b (f32)
        ],
        out_specs=pl.BlockSpec((tm, PAD), lambda i: (i, 0)),
        compiler_params=pltpu.CompilerParams(
            dimension_semantics=("parallel",),
            vmem_limit_bytes=vmem_limit),
    )(p_sum, inv_cnt, h, w, b)


def _final_call(p_sum, h, w3, b3, wc, bc, *, tm, vmem_limit):
    npad = p_sum.shape[0]
    return pl.pallas_call(
        gcn_final_kernel,
        out_shape=jax.ShapeDtypeStruct((npad, PAD), jnp.float32),
        grid=(npad // tm,),
        in_specs=[
            pl.BlockSpec((tm, npad), lambda i: (i, 0)),
            pl.BlockSpec((npad, PAD), lambda i: (0, 0)),
            pl.BlockSpec((PAD, PAD), lambda i: (0, 0)),
            pl.BlockSpec((1, PAD), lambda i: (0, 0)),
            pl.BlockSpec((PAD, PAD), lambda i: (0, 0)),
            pl.BlockSpec((1, PAD), lambda i: (0, 0)),
        ],
        out_specs=pl.BlockSpec((tm, PAD), lambda i: (i, 0)),
        compiler_params=pltpu.CompilerParams(
            dimension_semantics=("parallel",),
            vmem_limit_bytes=vmem_limit),
    )(p_sum, h, w3, b3, wc, bc)


# ------------------------------------------------------------------ forward ---

@functools.partial(jax.jit,
                   static_argnames=("num_classes", "tm", "fused", "vmem_limit"))
def gcn3_forward(x, p_sum, inv_cnt, params, *, num_classes, tm, fused, vmem_limit):
    n = x.shape[0]
    npad = p_sum.shape[0]

    # Lane-pad features / parameters (zero padding is exact through tanh;
    # padded rows are killed by the zero-padded columns of P).
    xp = _pad2(x, npad, PAD).astype(jnp.bfloat16)
    w1 = _pad2(params["w1"], PAD, PAD).astype(jnp.bfloat16)
    w2 = _pad2(params["w2"], PAD, PAD).astype(jnp.bfloat16)
    w3 = _pad2(params["w3"], PAD, PAD).astype(jnp.bfloat16)
    wc = _pad2(params["wc"], PAD, PAD).astype(jnp.bfloat16)
    b1 = _pad2(params["b1"][None, :], 1, PAD)
    b2 = _pad2(params["b2"][None, :], 1, PAD)
    b3 = _pad2(params["b3"][None, :], 1, PAD)
    bc = _pad2(params["bc"][None, :], 1, PAD)

    if fused:
        out = _fused_call(p_sum, inv_cnt, xp, w1, b1, w2, b2, w3, b3, wc, bc,
                          vmem_limit=vmem_limit)
    else:
        h1 = _layer_call(p_sum, inv_cnt, xp, w1, b1, tm=tm, vmem_limit=vmem_limit)
        h2 = _layer_call(p_sum, inv_cnt, h1, w2, b2, tm=tm, vmem_limit=vmem_limit)
        out = _final_call(p_sum, h2, w3, b3, wc, bc, tm=tm, vmem_limit=vmem_limit)
    return out[:n, :num_classes]


# ---------------------------------------------------------------- reference ---

def gcn3_reference(x, edge_index, params, num_classes):
    """Pure-JAX f32 reference for correctness checking."""
    n = x.shape[0]
    src, dst = edge_index[0], edge_index[1]
    loops = jnp.arange(n, dtype=edge_index.dtype)
    src = jnp.concatenate([src, loops])
    dst = jnp.concatenate([dst, loops])
    a_hat = jnp.zeros((n, n), jnp.float32).at[dst, src].add(1.0)
    deg = a_hat.sum(axis=1)
    dinv = jnp.where(deg > 0, 1.0 / jnp.sqrt(deg), 0.0)
    p_sum = a_hat * dinv[:, None] * dinv[None, :]
    p_mean = p_sum / jnp.where(deg > 0, deg, 1.0)[:, None]
    h = jnp.tanh(p_mean @ (x @ params["w1"]) + params["b1"])
    h = jnp.tanh(p_mean @ (h @ params["w2"]) + params["b2"])
    h = jnp.tanh(p_sum @ (h @ params["w3"]) + params["b3"])
    return h @ params["wc"] + params["bc"]


def init_params(key, num_features, num_classes, hidden_channel=4):
    """Deterministic synthetic parameters matching GCN3.__init__ shapes."""
    ks = jax.random.split(key, 8)
    s = 0.5
    return dict(
        w1=jax.random.normal(ks[0], (num_features, hidden_channel), jnp.float32) * s,
        b1=jnp.zeros((hidden_channel,), jnp.float32),
        w2=jax.random.normal(ks[1], (hidden_channel, hidden_channel), jnp.float32) * s,
        b2=jnp.zeros((hidden_channel,), jnp.float32),
        w3=jax.random.normal(ks[2], (hidden_channel, 2), jnp.float32) * s,
        b3=jnp.zeros((2,), jnp.float32),
        wc=jax.random.normal(ks[3], (2, num_classes), jnp.float32) * s,
        bc=jax.random.normal(ks[4], (num_classes,), jnp.float32) * 0.1,
    )


if __name__ == "__main__":
    num_features = 4
    num_classes = 3
    hidden_channel = 4

    key = jax.random.PRNGKey(0)
    k_x1, k_x2, k_p = jax.random.split(key, 3)
    params = init_params(k_p, num_features, num_classes, hidden_channel)

    def ring_edges(n):
        src = jnp.arange(n, dtype=jnp.int32)
        dst = (src + 1) % n
        return jnp.stack([jnp.concatenate([src, dst]),
                          jnp.concatenate([dst, src])], axis=0)   # [2, 2*N]

    # --- small graph: fused path (P DMA'd once, resident across all layers) ---
    n1 = 16
    x1 = jax.random.normal(k_x1, (n1, num_features), jnp.float32)
    e1 = ring_edges(n1)
    p1, inv1, cfg1 = gcn3_prepare(e1, n1)
    out1 = jax.block_until_ready(
        gcn3_forward(x1, p1, inv1, params, num_classes=num_classes, **cfg1))
    ref1 = gcn3_reference(x1, e1, params, num_classes)
    assert out1.shape == (n1, num_classes)
    assert jnp.allclose(out1, ref1, atol=3e-2, rtol=3e-2), (
        float(jnp.max(jnp.abs(out1 - ref1))))

    # --- medium graph: force the row-tiled multi-step path (large-graph mode) ---
    n2 = 300
    x2 = jax.random.normal(k_x2, (n2, num_features), jnp.float32)
    e2 = ring_edges(n2)
    p2, inv2, cfg2 = gcn3_prepare(e2, n2, force_tiled=True)
    out2 = jax.block_until_ready(
        gcn3_forward(x2, p2, inv2, params, num_classes=num_classes, **cfg2))
    ref2 = gcn3_reference(x2, e2, params, num_classes)
    assert out2.shape == (n2, num_classes)
    assert jnp.allclose(out2, ref2, atol=3e-2, rtol=3e-2), (
        float(jnp.max(jnp.abs(out2 - ref2))))

    print("KERNEL_OK")
</pallas_src>

<mosaic_0001>
module attributes {stable_mosaic.version = 11 : i64} {
  func.func @gcn3_fused_kernel(%arg0: memref<128x128xbf16, #tpu.memory_space<vmem>>, %arg1: memref<128x1xf32, #tpu.memory_space<vmem>>, %arg2: memref<128x128xbf16, #tpu.memory_space<vmem>>, %arg3: memref<128x128xbf16, #tpu.memory_space<vmem>>, %arg4: memref<1x128xf32, #tpu.memory_space<vmem>>, %arg5: memref<128x128xbf16, #tpu.memory_space<vmem>>, %arg6: memref<1x128xf32, #tpu.memory_space<vmem>>, %arg7: memref<128x128xbf16, #tpu.memory_space<vmem>>, %arg8: memref<1x128xf32, #tpu.memory_space<vmem>>, %arg9: memref<128x128xbf16, #tpu.memory_space<vmem>>, %arg10: memref<1x128xf32, #tpu.memory_space<vmem>>, %arg11: memref<128x128xf32, #tpu.memory_space<vmem>>) attributes {dimension_semantics = [], scalar_prefetch = 0 : i64, scratch_operands = 0 : i64, tpu.core_type = #tpu.core_type<tc>} {
    %c0 = arith.constant 0 : index
    %c0_0 = arith.constant 0 : index
    %0 = vector.load %arg0[%c0, %c0_0] : memref<128x128xbf16, #tpu.memory_space<vmem>>, vector<128x128xbf16>
    %c0_1 = arith.constant 0 : index
    %c0_2 = arith.constant 0 : index
    %1 = vector.load %arg1[%c0_1, %c0_2] : memref<128x1xf32, #tpu.memory_space<vmem>>, vector<128x1xf32>
    %c0_3 = arith.constant 0 : index
    %c0_4 = arith.constant 0 : index
    %2 = vector.load %arg2[%c0_3, %c0_4] : memref<128x128xbf16, #tpu.memory_space<vmem>>, vector<128x128xbf16>
    %c0_5 = arith.constant 0 : index
    %c0_6 = arith.constant 0 : index
    %3 = vector.load %arg3[%c0_5, %c0_6] : memref<128x128xbf16, #tpu.memory_space<vmem>>, vector<128x128xbf16>
    %c0_7 = arith.constant 0 : index
    %c0_8 = arith.constant 0 : index
    %4 = vector.load %arg4[%c0_7, %c0_8] : memref<1x128xf32, #tpu.memory_space<vmem>>, vector<1x128xf32>
    %cst = arith.constant dense<0.000000e+00> : vector<128x128xf32>
    %5 = tpu.matmul %0, %2, %cst {dimension_numbers = #tpu.dot_dimension_numbers<[1], [0], [0], [1], [0, 0, 1, 1], [], []>} : vector<128x128xbf16>, vector<128x128xbf16>, vector<128x128xf32> -> vector<128x128xf32>
    %6 = vector.broadcast %1 : vector<128x1xf32> to vector<128x128xf32>
    %7 = arith.mulf %5, %6 : vector<128x128xf32>
    %8 = arith.truncf %7 : vector<128x128xf32> to vector<128x128xbf16>
    %cst_9 = arith.constant dense<0.000000e+00> : vector<128x128xf32>
    %9 = tpu.matmul %8, %3, %cst_9 {dimension_numbers = #tpu.dot_dimension_numbers<[1], [0], [0], [1], [0, 0, 1, 1], [], []>} : vector<128x128xbf16>, vector<128x128xbf16>, vector<128x128xf32> -> vector<128x128xf32>
    %10 = vector.broadcast %4 : vector<1x128xf32> to vector<128x128xf32>
    %11 = arith.addf %9, %10 : vector<128x128xf32>
    %12 = math.tanh %11 : vector<128x128xf32>
    %13 = arith.truncf %12 : vector<128x128xf32> to vector<128x128xbf16>
    %c0_10 = arith.constant 0 : index
    %c0_11 = arith.constant 0 : index
    %14 = vector.load %arg5[%c0_10, %c0_11] : memref<128x128xbf16, #tpu.memory_space<vmem>>, vector<128x128xbf16>
    %c0_12 = arith.constant 0 : index
    %c0_13 = arith.constant 0 : index
    %15 = vector.load %arg6[%c0_12, %c0_13] : memref<1x128xf32, #tpu.memory_space<vmem>>, vector<1x128xf32>
    %cst_14 = arith.constant dense<0.000000e+00> : vector<128x128xf32>
    %16 = tpu.matmul %0, %13, %cst_14 {dimension_numbers = #tpu.dot_dimension_numbers<[1], [0], [0], [1], [0, 0, 1, 1], [], []>} : vector<128x128xbf16>, vector<128x128xbf16>, vector<128x128xf32> -> vector<128x128xf32>
    %17 = vector.broadcast %1 : vector<128x1xf32> to vector<128x128xf32>
    %18 = arith.mulf %16, %17 : vector<128x128xf32>
    %19 = arith.truncf %18 : vector<128x128xf32> to vector<128x128xbf16>
    %cst_15 = arith.constant dense<0.000000e+00> : vector<128x128xf32>
    %20 = tpu.matmul %19, %14, %cst_15 {dimension_numbers = #tpu.dot_dimension_numbers<[1], [0], [0], [1], [0, 0, 1, 1], [], []>} : vector<128x128xbf16>, vector<128x128xbf16>, vector<128x128xf32> -> vector<128x128xf32>
    %21 = vector.broadcast %15 : vector<1x128xf32> to vector<128x128xf32>
    %22 = arith.addf %20, %21 : vector<128x128xf32>
    %23 = math.tanh %22 : vector<128x128xf32>
    %24 = arith.truncf %23 : vector<128x128xf32> to vector<128x128xbf16>
    %c0_16 = arith.constant 0 : index
    %c0_17 = arith.constant 0 : index
    %25 = vector.load %arg7[%c0_16, %c0_17] : memref<128x128xbf16, #tpu.memory_space<vmem>>, vector<128x128xbf16>
    %c0_18 = arith.constant 0 : index
    %c0_19 = arith.constant 0 : index
    %26 = vector.load %arg8[%c0_18, %c0_19] : memref<1x128xf32, #tpu.memory_space<vmem>>, vector<1x128xf32>
    %cst_20 = arith.constant dense<0.000000e+00> : vector<128x128xf32>
    %27 = tpu.matmul %0, %24, %cst_20 {dimension_numbers = #tpu.dot_dimension_numbers<[1], [0], [0], [1], [0, 0, 1, 1], [], []>} : vector<128x128xbf16>, vector<128x128xbf16>, vector<128x128xf32> -> vector<128x128xf32>
    %28 = arith.truncf %27 : vector<128x128xf32> to vector<128x128xbf16>
    %cst_21 = arith.constant dense<0.000000e+00> : vector<128x128xf32>
    %29 = tpu.matmul %28, %25, %cst_21 {dimension_numbers = #tpu.dot_dimension_numbers<[1], [0], [0], [1], [0, 0, 1, 1], [], []>} : vector<128x128xbf16>, vector<128x128xbf16>, vector<128x128xf32> -> vector<128x128xf32>
    %30 = vector.broadcast %26 : vector<1x128xf32> to vector<128x128xf32>
    %31 = arith.addf %29, %30 : vector<128x128xf32>
    %32 = math.tanh %31 : vector<128x128xf32>
    %33 = arith.truncf %32 : vector<128x128xf32> to vector<128x128xbf16>
    %c0_22 = arith.constant 0 : index
    %c0_23 = arith.constant 0 : index
    %34 = vector.load %arg9[%c0_22, %c0_23] : memref<128x128xbf16, #tpu.memory_space<vmem>>, vector<128x128xbf16>
    %cst_24 = arith.constant dense<0.000000e+00> : vector<128x128xf32>
    %35 = tpu.matmul %33, %34, %cst_24 {dimension_numbers = #tpu.dot_dimension_numbers<[1], [0], [0], [1], [0, 0, 1, 1], [], []>} : vector<128x128xbf16>, vector<128x128xbf16>, vector<128x128xf32> -> vector<128x128xf32>
    %c0_25 = arith.constant 0 : index
    %c0_26 = arith.constant 0 : index
    %36 = vector.load %arg10[%c0_25, %c0_26] : memref<1x128xf32, #tpu.memory_space<vmem>>, vector<1x128xf32>
    %37 = vector.broadcast %36 : vector<1x128xf32> to vector<128x128xf32>
    %38 = arith.addf %35, %37 : vector<128x128xf32>
    %c0_27 = arith.constant 0 : index
    %c0_28 = arith.constant 0 : index
    %39 = vector.load %arg11[%c0_27, %c0_28] : memref<128x128xf32, #tpu.memory_space<vmem>>, vector<128x128xf32>
    tpu.vector_store %arg11[%c0_27, %c0_28], %38 {strides = array<i32>} : memref<128x128xf32, #tpu.memory_space<vmem>>, vector<128x128xf32>,
    return
  }
}

</mosaic_0001>

<llo_original>
// kernel: gcn3_forward.1
$region0: #{gcn3_forward.1}
  #allocation0 [shape = 'u32[]', space=smem, size = 0x4, offset = 0x4, fixed_abs, tag = 'smem constant byte address 0x4 - core index']
  #allocation1 [shape = 'u32[144,128]{1,0:T(1,128)}', space=vmem, size = 0x12000, scoped, tag = 'internal scratch']
  %s0 = inlined_call_operand.vmem [shape: bf16[128,128], index: 0, kind: input, shape index: {}]
  %s1 = inlined_call_operand.vmem [shape: f32[128,1], index: 1, kind: input, shape index: {}]
  %s2 = inlined_call_operand.vmem [shape: bf16[128,128], index: 2, kind: input, shape index: {}]
  %s3 = inlined_call_operand.vmem [shape: bf16[128,128], index: 3, kind: input, shape index: {}]
  %s4 = inlined_call_operand.vmem [shape: f32[1,128], index: 4, kind: input, shape index: {}]
  %s5 = inlined_call_operand.vmem [shape: bf16[128,128], index: 5, kind: input, shape index: {}]
  %s6 = inlined_call_operand.vmem [shape: f32[1,128], index: 6, kind: input, shape index: {}]
  %s7 = inlined_call_operand.vmem [shape: bf16[128,128], index: 7, kind: input, shape index: {}]
  %s8 = inlined_call_operand.vmem [shape: f32[1,128], index: 8, kind: input, shape index: {}]
  %s9 = inlined_call_operand.vmem [shape: bf16[128,128], index: 9, kind: input, shape index: {}]
  %s10 = inlined_call_operand.vmem [shape: f32[1,128], index: 10, kind: input, shape index: {}]
  %s11 = inlined_call_operand.vmem [shape: f32[128,128], index: 11, kind: output, shape index: {}]
  %s12 = sld [smem:[#allocation0]]
  $region54: #{gcn3_forward.1} parent=0
    _
  %s14 = ssub.s32 1, %s12
  %s15 = scalar_select 0, %s14, %s12
  // Predicated region
  $region2: #{gcn3_forward.1} parent=0 // pred_check
    _
  $region3: #{gcn3_forward.1} parent=0 // pred_check_branch
    %17 = sbr.rel (0) target = $region5
  $region4: #{gcn3_forward.1} parent=0 // pred_region
    _
  $region5: #{gcn3_forward.1} parent=0 // pred_fallthru
    _
  // Predicated region
  $region6: #{gcn3_forward.1} parent=0 // pred_check
    _
  $region7: #{gcn3_forward.1} parent=0 // pred_check_branch
    %19 = sbr.rel (0) target = $region9
  $region8: #{gcn3_forward.1} parent=0 // pred_region
    _
  $region9: #{gcn3_forward.1} parent=0 // pred_fallthru
    _
  // Predicated region
  $region10: #{gcn3_forward.1} parent=0 // pred_check
    _
  $region11: #{gcn3_forward.1} parent=0 // pred_check_branch
    %21 = sbr.rel (0) target = $region13
  $region12: #{gcn3_forward.1} parent=0 // pred_region
    _
  $region13: #{gcn3_forward.1} parent=0 // pred_fallthru
    _
  // Predicated region
  $region14: #{gcn3_forward.1} parent=0 // pred_check
    _
  $region15: #{gcn3_forward.1} parent=0 // pred_check_branch
    %23 = sbr.rel (0) target = $region17
  $region16: #{gcn3_forward.1} parent=0 // pred_region
    _
  $region17: #{gcn3_forward.1} parent=0 // pred_fallthru
    _
  // Predicated region
  $region18: #{gcn3_forward.1} parent=0 // pred_check
    _
  $region19: #{gcn3_forward.1} parent=0 // pred_check_branch
    %25 = sbr.rel (0) target = $region21
  $region20: #{gcn3_forward.1} parent=0 // pred_region
    _
  $region21: #{gcn3_forward.1} parent=0 // pred_fallthru
    _
  // Predicated region
  $region22: #{gcn3_forward.1} parent=0 // pred_check
    _
  $region23: #{gcn3_forward.1} parent=0 // pred_check_branch
    %27 = sbr.rel (0) target = $region25
  $region24: #{gcn3_forward.1} parent=0 // pred_region
    _
  $region25: #{gcn3_forward.1} parent=0 // pred_fallthru
    _
  // Predicated region
  $region26: #{gcn3_forward.1} parent=0 // pred_check
    _
  $region27: #{gcn3_forward.1} parent=0 // pred_check_branch
    %29 = sbr.rel (0) target = $region29
  $region28: #{gcn3_forward.1} parent=0 // pred_region
    _
  $region29: #{gcn3_forward.1} parent=0 // pred_fallthru
    _
  // Predicated region
  $region30: #{gcn3_forward.1} parent=0 // pred_check
    _
  $region31: #{gcn3_forward.1} parent=0 // pred_check_branch
    %31 = sbr.rel (0) target = $region33
  $region32: #{gcn3_forward.1} parent=0 // pred_region
    _
  $region33: #{gcn3_forward.1} parent=0 // pred_fallthru
    _
  // Predicated region
  $region34: #{gcn3_forward.1} parent=0 // pred_check
    _
  $region35: #{gcn3_forward.1} parent=0 // pred_check_branch
    %33 = sbr.rel (0) target = $region37
  $region36: #{gcn3_forward.1} parent=0 // pred_region
    _
  $region37: #{gcn3_forward.1} parent=0 // pred_fallthru
    _
  // Predicated region
  $region38: #{gcn3_forward.1} parent=0 // pred_check
    _
  $region39: #{gcn3_forward.1} parent=0 // pred_check_branch
    %35 = sbr.rel (0) target = $region41
  $region40: #{gcn3_forward.1} parent=0 // pred_region
    _
  $region41: #{gcn3_forward.1} parent=0 // pred_fallthru
    _
  // Predicated region
  $region42: #{gcn3_forward.1} parent=0 // pred_check
    _
  $region43: #{gcn3_forward.1} parent=0 // pred_check_branch
    %37 = sbr.rel (0) target = $region45
  $region44: #{gcn3_forward.1} parent=0 // pred_region
    _
  $region45: #{gcn3_forward.1} parent=0 // pred_fallthru
    _
  %v39 = vld [vmem:[%s0] sm:$0xf]
  %v40 = vld [vmem:[%s0 + $0x4] sm:$0xf]
  %v41 = vld [vmem:[%s0 + $0x8] sm:$0xf]
  %v42 = vld [vmem:[%s0 + $0xc] sm:$0xf]
  %v43 = vld [vmem:[%s0 + $0x10] sm:$0xf]
  %v44 = vld [vmem:[%s0 + $0x14] sm:$0xf]
  %v45 = vld [vmem:[%s0 + $0x18] sm:$0xf]
  %v46 = vld [vmem:[%s0 + $0x1c] sm:$0xf]
  %v47 = vld [vmem:[%s0 + $0x20] sm:$0xf]
  %v48 = vld [vmem:[%s0 + $0x24] sm:$0xf]
  %v49 = vld [vmem:[%s0 + $0x28] sm:$0xf]
  %v50 = vld [vmem:[%s0 + $0x2c] sm:$0xf]
  %v51 = vld [vmem:[%s0 + $0x30] sm:$0xf]
  %v52 = vld [vmem:[%s0 + $0x34] sm:$0xf]
  %v53 = vld [vmem:[%s0 + $0x38] sm:$0xf]
  %v54 = vld [vmem:[%s0 + $0x3c] sm:$0xf]
  %v55 = vld [vmem:[%s1] sm:$0xff]
  %v56 = vld [vmem:[%s1 + $0x8] sm:$0xff]
  %v57 = vld [vmem:[%s1 + $0x10] sm:$0xff]
  %v58 = vld [vmem:[%s1 + $0x18] sm:$0xff]
  %v59 = vld [vmem:[%s1 + $0x20] sm:$0xff]
  %v60 = vld [vmem:[%s1 + $0x28] sm:$0xff]
  %v61 = vld [vmem:[%s1 + $0x30] sm:$0xff]
  %v62 = vld [vmem:[%s1 + $0x38] sm:$0xff]
  %v63 = vld [vmem:[%s1 + $0x40] sm:$0xff]
  %v64 = vld [vmem:[%s1 + $0x48] sm:$0xff]
  %v65 = vld [vmem:[%s1 + $0x50] sm:$0xff]
  %v66 = vld [vmem:[%s1 + $0x58] sm:$0xff]
  %v67 = vld [vmem:[%s1 + $0x60] sm:$0xff]
  %v68 = vld [vmem:[%s1 + $0x68] sm:$0xff]
  %v69 = vld [vmem:[%s1 + $0x70] sm:$0xff]
  %v70 = vld [vmem:[%s1 + $0x78] sm:$0xff]
  %v71 = vld [vmem:[%s2] sm:$0xf]
  %v72 = vld [vmem:[%s2 + $0x4] sm:$0xf]
  %v73 = vld [vmem:[%s2 + $0x8] sm:$0xf]
  %v74 = vld [vmem:[%s2 + $0xc] sm:$0xf]
  %v75 = vld [vmem:[%s2 + $0x10] sm:$0xf]
  %v76 = vld [vmem:[%s2 + $0x14] sm:$0xf]
  %v77 = vld [vmem:[%s2 + $0x18] sm:$0xf]
  %v78 = vld [vmem:[%s2 + $0x1c] sm:$0xf]
  %v79 = vld [vmem:[%s2 + $0x20] sm:$0xf]
  %v80 = vld [vmem:[%s2 + $0x24] sm:$0xf]
  %v81 = vld [vmem:[%s2 + $0x28] sm:$0xf]
  %v82 = vld [vmem:[%s2 + $0x2c] sm:$0xf]
  %v83 = vld [vmem:[%s2 + $0x30] sm:$0xf]
  %v84 = vld [vmem:[%s2 + $0x34] sm:$0xf]
  %v85 = vld [vmem:[%s2 + $0x38] sm:$0xf]
  %v86 = vld [vmem:[%s2 + $0x3c] sm:$0xf]
  %v87 = vld [vmem:[%s3] sm:$0xf]
  %v88 = vld [vmem:[%s3 + $0x4] sm:$0xf]
  %v89 = vld [vmem:[%s3 + $0x8] sm:$0xf]
  %v90 = vld [vmem:[%s3 + $0xc] sm:$0xf]
  %v91 = vld [vmem:[%s3 + $0x10] sm:$0xf]
  %v92 = vld [vmem:[%s3 + $0x14] sm:$0xf]
  %v93 = vld [vmem:[%s3 + $0x18] sm:$0xf]
  %v94 = vld [vmem:[%s3 + $0x1c] sm:$0xf]
  %v95 = vld [vmem:[%s3 + $0x20] sm:$0xf]
  %v96 = vld [vmem:[%s3 + $0x24] sm:$0xf]
  %v97 = vld [vmem:[%s3 + $0x28] sm:$0xf]
  %v98 = vld [vmem:[%s3 + $0x2c] sm:$0xf]
  %v99 = vld [vmem:[%s3 + $0x30] sm:$0xf]
  %v100 = vld [vmem:[%s3 + $0x34] sm:$0xf]
  %v101 = vld [vmem:[%s3 + $0x38] sm:$0xf]
  %v102 = vld [vmem:[%s3 + $0x3c] sm:$0xf]
  %v103 = vld [vmem:[%s4] sm:$0x1]
  %v120 = vunpack.c.l.b16 %v39
  %v121 = vunpack.c.l.b16 %v40
  %v122 = vunpack.c.l.b16 %v41
  %v123 = vunpack.c.l.b16 %v42
  %v124 = vunpack.c.l.b16 %v43
  %v125 = vunpack.c.l.b16 %v44
  %v126 = vunpack.c.l.b16 %v45
  %v127 = vunpack.c.l.b16 %v46
  %v128 = vunpack.c.l.b16 %v47
  %v129 = vunpack.c.l.b16 %v48
  %v130 = vunpack.c.l.b16 %v49
  %v131 = vunpack.c.l.b16 %v50
  %v132 = vunpack.c.l.b16 %v51
  %v133 = vunpack.c.l.b16 %v52
  %v134 = vunpack.c.l.b16 %v53
  %v135 = vunpack.c.l.b16 %v54
  %v136 = vpack.c.b16 %v121, %v120
  %v137 = vpack.c.b16 %v123, %v122
  %v138 = vpack.c.b16 %v125, %v124
  %v139 = vpack.c.b16 %v127, %v126
  %v140 = vpack.c.b16 %v129, %v128
  %v141 = vpack.c.b16 %v131, %v130
  %v142 = vpack.c.b16 %v133, %v132
  %v143 = vpack.c.b16 %v135, %v134
  %v168 = vunpack.c.l.b16 %v71
  %v169 = vunpack.c.l.b16 %v72
  %v170 = vunpack.c.l.b16 %v73
  %v171 = vunpack.c.l.b16 %v74
  %v172 = vunpack.c.l.b16 %v75
  %v173 = vunpack.c.l.b16 %v76
  %v174 = vunpack.c.l.b16 %v77
  %v175 = vunpack.c.l.b16 %v78
  %v176 = vunpack.c.l.b16 %v79
  %v177 = vunpack.c.l.b16 %v80
  %v178 = vunpack.c.l.b16 %v81
  %v179 = vunpack.c.l.b16 %v82
  %v180 = vunpack.c.l.b16 %v83
  %v181 = vunpack.c.l.b16 %v84
  %v182 = vunpack.c.l.b16 %v85
  %v183 = vunpack.c.l.b16 %v86
  %v184 = vpack.c.b16 %v169, %v168
  %v185 = vpack.c.b16 %v171, %v170
  %v186 = vpack.c.b16 %v173, %v172
  %v187 = vpack.c.b16 %v175, %v174
  %v188 = vpack.c.b16 %v177, %v176
  %v189 = vpack.c.b16 %v179, %v178
  %v190 = vpack.c.b16 %v181, %v180
  %v191 = vpack.c.b16 %v183, %v182
  %200 = vmatprep.subr.bf16.mxu0 0
  %201 = vmatpush1.bf16.msra.mxu0 %v184
  %202 = vmatprep.subr.bf16.mxu0 0
  %203 = vmatpush1.bf16.msra.mxu0 %v185
  %204 = vmatprep.subr.bf16.mxu0 0
  %205 = vmatpush1.bf16.msra.mxu0 %v186
  %206 = vmatprep.subr.bf16.mxu0 0
  %207 = vmatpush1.bf16.msra.mxu0 %v187
  %208 = vmatprep.subr.bf16.mxu0 0
  %209 = vmatpush1.bf16.msra.mxu0 %v188
  %210 = vmatprep.subr.bf16.mxu0 0
  %211 = vmatpush1.bf16.msra.mxu0 %v189
  %212 = vmatprep.subr.bf16.mxu0 0
  %213 = vmatpush1.bf16.msra.mxu0 %v190
  %214 = vmatprep.subr.bf16.mxu0 0
  %215 = vmatpush1.bf16.msra.mxu0 %v191
  %216 = vmatprep.subr.bf16.mxu0 0
  %217 = vmatpush1.bf16.msra.mxu0 0
  %218 = vmatprep.subr.bf16.mxu0 0
  %219 = vmatpush1.bf16.msra.mxu0 0
  %220 = vmatprep.subr.bf16.mxu0 0
  %221 = vmatpush1.bf16.msra.mxu0 0
  %222 = vmatprep.subr.bf16.mxu0 0
  %223 = vmatpush1.bf16.msra.mxu0 0
  %224 = vmatprep.subr.bf16.mxu0 0
  %225 = vmatpush1.bf16.msra.mxu0 0
  %226 = vmatprep.subr.bf16.mxu0 0
  %227 = vmatpush1.bf16.msra.mxu0 0
  %228 = vmatprep.subr.bf16.mxu0 0
  %229 = vmatpush1.bf16.msra.mxu0 0
  %230 = vmatprep.subr.bf16.mxu0 0
  %231 = vmatpush1.bf16.msra.mxu0 0
  %232 = vmatprep.mubr.bf16.mxu0 0
  %233 = vmatmul.mubr.bf16.gmra.mrb[0].mxu0 %v136
  %v234 = vpop.f32.mrb[0].mxu0
  %v235 = vadd.f32 0.0, %v234
  %v236 = vpop.f32.mrb[0].mxu0
  %v237 = vpop.f32.mrb[0].mxu0
  %v238 = vadd.f32 0.0, %v237
  %v239 = vpop.f32.mrb[0].mxu0
  %240 = vmatprep.mubr.bf16.mxu0 0
  %241 = vmatmul.mubr.bf16.gmra.mrb[0].mxu0 %v137
  %v242 = vpop.f32.mrb[0].mxu0
  %v243 = vadd.f32 0.0, %v242
  %v244 = vpop.f32.mrb[0].mxu0
  %v245 = vpop.f32.mrb[0].mxu0
  %v246 = vadd.f32 0.0, %v245
  %v247 = vpop.f32.mrb[0].mxu0
  %248 = vmatprep.mubr.bf16.mxu0 0
  %249 = vmatmul.mubr.bf16.gmra.mrb[0].mxu0 %v138
  %v250 = vpop.f32.mrb[0].mxu0
  %v251 = vadd.f32 0.0, %v250
  %v252 = vpop.f32.mrb[0].mxu0
  %v253 = vpop.f32.mrb[0].mxu0
  %v254 = vadd.f32 0.0, %v253
  %v255 = vpop.f32.mrb[0].mxu0
  %256 = vmatprep.mubr.bf16.mxu0 0
  %257 = vmatmul.mubr.bf16.gmra.mrb[0].mxu0 %v139
  %v258 = vpop.f32.mrb[0].mxu0
  %v259 = vadd.f32 0.0, %v258
  %v260 = vpop.f32.mrb[0].mxu0
  %v261 = vpop.f32.mrb[0].mxu0
  %v262 = vadd.f32 0.0, %v261
  %v263 = vpop.f32.mrb[0].mxu0
  %264 = vmatprep.mubr.bf16.mxu0 0
  %265 = vmatmul.mubr.bf16.gmra.mrb[0].mxu0 %v140
  %v266 = vpop.f32.mrb[0].mxu0
  %v267 = vadd.f32 0.0, %v266
  %v268 = vpop.f32.mrb[0].mxu0
  %v269 = vpop.f32.mrb[0].mxu0
  %v270 = vadd.f32 0.0, %v269
  %v271 = vpop.f32.mrb[0].mxu0
  %272 = vmatprep.mubr.bf16.mxu0 0
  %273 = vmatmul.mubr.bf16.gmra.mrb[0].mxu0 %v141
  %v274 = vpop.f32.mrb[0].mxu0
  %v275 = vadd.f32 0.0, %v274
  %v276 = vpop.f32.mrb[0].mxu0
  %v277 = vpop.f32.mrb[0].mxu0
  %v278 = vadd.f32 0.0, %v277
  %v279 = vpop.f32.mrb[0].mxu0
  %280 = vmatprep.mubr.bf16.mxu0 0
  %281 = vmatmul.mubr.bf16.gmra.mrb[0].mxu0 %v142
  %v282 = vpop.f32.mrb[0].mxu0
  %v283 = vadd.f32 0.0, %v282
  %v284 = vpop.f32.mrb[0].mxu0
  %v285 = vpop.f32.mrb[0].mxu0
  %v286 = vadd.f32 0.0, %v285
  %v287 = vpop.f32.mrb[0].mxu0
  %288 = vmatprep.mubr.bf16.mxu0 0
  %289 = vmatmul.mubr.bf16.gmra.mrb[0].mxu0 %v143
  %v290 = vpop.f32.mrb[0].mxu0
  %v291 = vadd.f32 0.0, %v290
  %v292 = vpop.f32.mrb[0].mxu0
  %v293 = vpop.f32.mrb[0].mxu0
  %v294 = vadd.f32 0.0, %v293
  %v295 = vpop.f32.mrb[0].mxu0
  %296 = vdwg.mxu0
  %298 = vset.pattern.permute.xlu0 0
  %299 = vperm.xlu0 %298, %v55
  %v300 = vpop.permute.xlu0 %299
  %303 = vset.pattern.permute.xlu0 0
  %304 = vperm.xlu0 %303, %v56
  %v305 = vpop.permute.xlu0 %304
  %308 = vset.pattern.permute.xlu0 0
  %309 = vperm.xlu0 %308, %v57
  %v310 = vpop.permute.xlu0 %309
  %313 = vset.pattern.permute.xlu0 0
  %314 = vperm.xlu0 %313, %v58
  %v315 = vpop.permute.xlu0 %314
  %318 = vset.pattern.permute.xlu0 0
  %319 = vperm.xlu0 %318, %v59
  %v320 = vpop.permute.xlu0 %319
  %323 = vset.pattern.permute.xlu0 0
  %324 = vperm.xlu0 %323, %v60
  %v325 = vpop.permute.xlu0 %324
  %328 = vset.pattern.permute.xlu0 0
  %329 = vperm.xlu0 %328, %v61
  %v330 = vpop.permute.xlu0 %329
  %333 = vset.pattern.permute.xlu0 0
  %334 = vperm.xlu0 %333, %v62
  %v335 = vpop.permute.xlu0 %334
  %338 = vset.pattern.permute.xlu0 0
  %339 = vperm.xlu0 %338, %v63
  %v340 = vpop.permute.xlu0 %339
  %343 = vset.pattern.permute.xlu0 0
  %344 = vperm.xlu0 %343, %v64
  %v345 = vpop.permute.xlu0 %344
  %348 = vset.pattern.permute.xlu0 0
  %349 = vperm.xlu0 %348, %v65
  %v350 = vpop.permute.xlu0 %349
  %353 = vset.pattern.permute.xlu0 0
  %354 = vperm.xlu0 %353, %v66
  %v355 = vpop.permute.xlu0 %354
  %358 = vset.pattern.permute.xlu0 0
  %359 = vperm.xlu0 %358, %v67
  %v360 = vpop.permute.xlu0 %359
  %363 = vset.pattern.permute.xlu0 0
  %364 = vperm.xlu0 %363, %v68
  %v365 = vpop.permute.xlu0 %364
  %368 = vset.pattern.permute.xlu0 0
  %369 = vperm.xlu0 %368, %v69
  %v370 = vpop.permute.xlu0 %369
  %373 = vset.pattern.permute.xlu0 0
  %374 = vperm.xlu0 %373, %v70
  %v375 = vpop.permute.xlu0 %374
  %v377 = vmul.f32 %v235, %v300
  %v378 = vmul.f32 %v238, %v305
  %v379 = vmul.f32 %v243, %v310
  %v380 = vmul.f32 %v246, %v315
  %v381 = vmul.f32 %v251, %v320
  %v382 = vmul.f32 %v254, %v325
  %v383 = vmul.f32 %v259, %v330
  %v384 = vmul.f32 %v262, %v335
  %v385 = vmul.f32 %v267, %v340
  %v386 = vmul.f32 %v270, %v345
  %v387 = vmul.f32 %v275, %v350
  %v388 = vmul.f32 %v278, %v355
  %v389 = vmul.f32 %v283, %v360
  %v390 = vmul.f32 %v286, %v365
  %v391 = vmul.f32 %v291, %v370
  %v392 = vmul.f32 %v294, %v375
  %v393 = vpack.c.bf16 %v378, %v377
  %v394 = vpack.c.bf16 %v380, %v379
  %v395 = vpack.c.bf16 %v382, %v381
  %v396 = vpack.c.bf16 %v384, %v383
  %v397 = vpack.c.bf16 %v386, %v385
  %v398 = vpack.c.bf16 %v388, %v387
  %v399 = vpack.c.bf16 %v390, %v389
  %v400 = vpack.c.bf16 %v392, %v391
  %v402 = vlaneseq
  %v403 = vshrl.u32 %v402, 7
  %v404 = vsub.s32 0, %v403
  %v405 = vrot.slane %v103, %v404
  %v423 = vunpack.c.l.b16 %v87
  %v424 = vunpack.c.l.b16 %v88
  %v425 = vunpack.c.l.b16 %v89
  %v426 = vunpack.c.l.b16 %v90
  %v427 = vunpack.c.l.b16 %v91
  %v428 = vunpack.c.l.b16 %v92
  %v429 = vunpack.c.l.b16 %v93
  %v430 = vunpack.c.l.b16 %v94
  %v431 = vunpack.c.l.b16 %v95
  %v432 = vunpack.c.l.b16 %v96
  %v433 = vunpack.c.l.b16 %v97
  %v434 = vunpack.c.l.b16 %v98
  %v435 = vunpack.c.l.b16 %v99
  %v436 = vunpack.c.l.b16 %v100
  %v437 = vunpack.c.l.b16 %v101
  %v438 = vunpack.c.l.b16 %v102
  %v439 = vpack.c.b16 %v424, %v423
  %v440 = vpack.c.b16 %v426, %v425
  %v441 = vpack.c.b16 %v428, %v427
  %v442 = vpack.c.b16 %v430, %v429
  %v443 = vpack.c.b16 %v432, %v431
  %v444 = vpack.c.b16 %v434, %v433
  %v445 = vpack.c.b16 %v436, %v435
  %v446 = vpack.c.b16 %v438, %v437
  %455 = vmatprep.subr.bf16.mxu0 0
  %456 = vmatpush1.bf16.msra.mxu0 %v439
  %457 = vmatprep.subr.bf16.mxu0 0
  %458 = vmatpush1.bf16.msra.mxu0 %v440
  %459 = vmatprep.subr.bf16.mxu0 0
  %460 = vmatpush1.bf16.msra.mxu0 %v441
  %461 = vmatprep.subr.bf16.mxu0 0
  %462 = vmatpush1.bf16.msra.mxu0 %v442
  %463 = vmatprep.subr.bf16.mxu0 0
  %464 = vmatpush1.bf16.msra.mxu0 %v443
  %465 = vmatprep.subr.bf16.mxu0 0
  %466 = vmatpush1.bf16.msra.mxu0 %v444
  %467 = vmatprep.subr.bf16.mxu0 0
  %468 = vmatpush1.bf16.msra.mxu0 %v445
  %469 = vmatprep.subr.bf16.mxu0 0
  %470 = vmatpush1.bf16.msra.mxu0 %v446
  %471 = vmatprep.subr.bf16.mxu0 0
  %472 = vmatpush1.bf16.msra.mxu0 0
  %473 = vmatprep.subr.bf16.mxu0 0
  %474 = vmatpush1.bf16.msra.mxu0 0
  %475 = vmatprep.subr.bf16.mxu0 0
  %476 = vmatpush1.bf16.msra.mxu0 0
  %477 = vmatprep.subr.bf16.mxu0 0
  %478 = vmatpush1.bf16.msra.mxu0 0
  %479 = vmatprep.subr.bf16.mxu0 0
  %480 = vmatpush1.bf16.msra.mxu0 0
  %481 = vmatprep.subr.bf16.mxu0 0
  %482 = vmatpush1.bf16.msra.mxu0 0
  %483 = vmatprep.subr.bf16.mxu0 0
  %484 = vmatpush1.bf16.msra.mxu0 0
  %485 = vmatprep.subr.bf16.mxu0 0
  %486 = vmatpush1.bf16.msra.mxu0 0
  %487 = vmatprep.mubr.bf16.mxu0 0
  %488 = vmatmul.mubr.bf16.gmra.mrb[0].mxu0 %v393
  %v489 = vpop.f32.mrb[0].mxu0
  %v490 = vadd.f32 %v405, %v489
  %v491 = vpop.f32.mrb[0].mxu0
  %v492 = vpop.f32.mrb[0].mxu0
  %v493 = vadd.f32 %v405, %v492
  %v494 = vpop.f32.mrb[0].mxu0
  %495 = vmatprep.mubr.bf16.mxu0 0
  %496 = vmatmul.mubr.bf16.gmra.mrb[0].mxu0 %v394
  %v497 = vpop.f32.mrb[0].mxu0
  %v498 = vadd.f32 %v405, %v497
  %v499 = vpop.f32.mrb[0].mxu0
  %v500 = vpop.f32.mrb[0].mxu0
  %v501 = vadd.f32 %v405, %v500
  %v502 = vpop.f32.mrb[0].mxu0
  %503 = vmatprep.mubr.bf16.mxu0 0
  %504 = vmatmul.mubr.bf16.gmra.mrb[0].mxu0 %v395
  %v505 = vpop.f32.mrb[0].mxu0
  %v506 = vadd.f32 %v405, %v505
  %v507 = vpop.f32.mrb[0].mxu0
  %v508 = vpop.f32.mrb[0].mxu0
  %v509 = vadd.f32 %v405, %v508
  %v510 = vpop.f32.mrb[0].mxu0
  %511 = vmatprep.mubr.bf16.mxu0 0
  %512 = vmatmul.mubr.bf16.gmra.mrb[0].mxu0 %v396
  %v513 = vpop.f32.mrb[0].mxu0
  %v514 = vadd.f32 %v405, %v513
  %v515 = vpop.f32.mrb[0].mxu0
  %v516 = vpop.f32.mrb[0].mxu0
  %v517 = vadd.f32 %v405, %v516
  %v518 = vpop.f32.mrb[0].mxu0
  %519 = vmatprep.mubr.bf16.mxu0 0
  %520 = vmatmul.mubr.bf16.gmra.mrb[0].mxu0 %v397
  %v521 = vpop.f32.mrb[0].mxu0
  %v522 = vadd.f32 %v405, %v521
  %v523 = vpop.f32.mrb[0].mxu0
  %v524 = vpop.f32.mrb[0].mxu0
  %v525 = vadd.f32 %v405, %v524
  %v526 = vpop.f32.mrb[0].mxu0
  %527 = vmatprep.mubr.bf16.mxu0 0
  %528 = vmatmul.mubr.bf16.gmra.mrb[0].mxu0 %v398
  %v529 = vpop.f32.mrb[0].mxu0
  %v530 = vadd.f32 %v405, %v529
  %v531 = vpop.f32.mrb[0].mxu0
  %v532 = vpop.f32.mrb[0].mxu0
  %v533 = vadd.f32 %v405, %v532
  %v534 = vpop.f32.mrb[0].mxu0
  %535 = vmatprep.mubr.bf16.mxu0 0
  %536 = vmatmul.mubr.bf16.gmra.mrb[0].mxu0 %v399
  %v537 = vpop.f32.mrb[0].mxu0
  %v538 = vadd.f32 %v405, %v537
  %v539 = vpop.f32.mrb[0].mxu0
  %v540 = vpop.f32.mrb[0].mxu0
  %v541 = vadd.f32 %v405, %v540
  %v542 = vpop.f32.mrb[0].mxu0
  %543 = vmatprep.mubr.bf16.mxu0 0
  %544 = vmatmul.mubr.bf16.gmra.mrb[0].mxu0 %v400
  %v545 = vpop.f32.mrb[0].mxu0
  %v546 = vadd.f32 %v405, %v545
  %v547 = vpop.f32.mrb[0].mxu0
  %v548 = vpop.f32.mrb[0].mxu0
  %v549 = vadd.f32 %v405, %v548
  %v550 = vpop.f32.mrb[0].mxu0
  %551 = vdwg.mxu0
  %v552 = vtanh.pop %v490
  %v553 = vtanh.pop %v493
  %v554 = vtanh.pop %v498
  %v555 = vtanh.pop %v501
  %v556 = vtanh.pop %v506
  %v557 = vtanh.pop %v509
  %v558 = vtanh.pop %v514
  %v559 = vtanh.pop %v517
  %v560 = vtanh.pop %v522
  %v561 = vtanh.pop %v525
  %v562 = vtanh.pop %v530
  %v563 = vtanh.pop %v533
  %v564 = vtanh.pop %v538
  %v565 = vtanh.pop %v541
  %v566 = vtanh.pop %v546
  %v567 = vtanh.pop %v549
  %v568 = vpack.c.bf16 %v553, %v552
  %v569 = vpack.c.bf16 %v555, %v554
  %v570 = vpack.c.bf16 %v557, %v556
  %v571 = vpack.c.bf16 %v559, %v558
  %v572 = vpack.c.bf16 %v561, %v560
  %v573 = vpack.c.bf16 %v563, %v562
  %v574 = vpack.c.bf16 %v565, %v564
  %v575 = vpack.c.bf16 %v567, %v566
  %v576 = vld [vmem:[%s5] sm:$0xf]
  %v577 = vld [vmem:[%s5 + $0x4] sm:$0xf]
  %v578 = vld [vmem:[%s5 + $0x8] sm:$0xf]
  %v579 = vld [vmem:[%s5 + $0xc] sm:$0xf]
  %v580 = vld [vmem:[%s5 + $0x10] sm:$0xf]
  %v581 = vld [vmem:[%s5 + $0x14] sm:$0xf]
  %v582 = vld [vmem:[%s5 + $0x18] sm:$0xf]
  %v583 = vld [vmem:[%s5 + $0x1c] sm:$0xf]
  %v584 = vld [vmem:[%s5 + $0x20] sm:$0xf]
  %v585 = vld [vmem:[%s5 + $0x24] sm:$0xf]
  %v586 = vld [vmem:[%s5 + $0x28] sm:$0xf]
  %v587 = vld [vmem:[%s5 + $0x2c] sm:$0xf]
  %v588 = vld [vmem:[%s5 + $0x30] sm:$0xf]
  %v589 = vld [vmem:[%s5 + $0x34] sm:$0xf]
  %v590 = vld [vmem:[%s5 + $0x38] sm:$0xf]
  %v591 = vld [vmem:[%s5 + $0x3c] sm:$0xf]
  %v592 = vld [vmem:[%s6] sm:$0x1]
  %593 = vmatprep.subr.bf16.mxu0 0
  %594 = vmatpush1.bf16.msra.mxu0 %v568
  %595 = vmatprep.subr.bf16.mxu0 0
  %596 = vmatpush1.bf16.msra.mxu0 %v569
  %597 = vmatprep.subr.bf16.mxu0 0
  %598 = vmatpush1.bf16.msra.mxu0 %v570
  %599 = vmatprep.subr.bf16.mxu0 0
  %600 = vmatpush1.bf16.msra.mxu0 %v571
  %601 = vmatprep.subr.bf16.mxu0 0
  %602 = vmatpush1.bf16.msra.mxu0 %v572
  %603 = vmatprep.subr.bf16.mxu0 0
  %604 = vmatpush1.bf16.msra.mxu0 %v573
  %605 = vmatprep.subr.bf16.mxu0 0
  %606 = vmatpush1.bf16.msra.mxu0 %v574
  %607 = vmatprep.subr.bf16.mxu0 0
  %608 = vmatpush1.bf16.msra.mxu0 %v575
  %609 = vmatprep.subr.bf16.mxu0 0
  %610 = vmatpush1.bf16.msra.mxu0 0
  %611 = vmatprep.subr.bf16.mxu0 0
  %612 = vmatpush1.bf16.msra.mxu0 0
  %613 = vmatprep.subr.bf16.mxu0 0
  %614 = vmatpush1.bf16.msra.mxu0 0
  %615 = vmatprep.subr.bf16.mxu0 0
  %616 = vmatpush1.bf16.msra.mxu0 0
  %617 = vmatprep.subr.bf16.mxu0 0
  %618 = vmatpush1.bf16.msra.mxu0 0
  %619 = vmatprep.subr.bf16.mxu0 0
  %620 = vmatpush1.bf16.msra.mxu0 0
  %621 = vmatprep.subr.bf16.mxu0 0
  %622 = vmatpush1.bf16.msra.mxu0 0
  %623 = vmatprep.subr.bf16.mxu0 0
  %624 = vmatpush1.bf16.msra.mxu0 0
  %625 = vmatprep.mubr.bf16.mxu0 0
  %626 = vmatmul.mubr.bf16.gmra.mrb[0].mxu0 %v136
  %v627 = vpop.f32.mrb[0].mxu0
  %v628 = vadd.f32 0.0, %v627
  %v629 = vpop.f32.mrb[0].mxu0
  %v630 = vpop.f32.mrb[0].mxu0
  %v631 = vadd.f32 0.0, %v630
  %v632 = vpop.f32.mrb[0].mxu0
  %633 = vmatprep.mubr.bf16.mxu0 0
  %634 = vmatmul.mubr.bf16.gmra.mrb[0].mxu0 %v137
  %v635 = vpop.f32.mrb[0].mxu0
  %v636 = vadd.f32 0.0, %v635
  %v637 = vpop.f32.mrb[0].mxu0
  %v638 = vpop.f32.mrb[0].mxu0
  %v639 = vadd.f32 0.0, %v638
  %v640 = vpop.f32.mrb[0].mxu0
  %641 = vmatprep.mubr.bf16.mxu0 0
  %642 = vmatmul.mubr.bf16.gmra.mrb[0].mxu0 %v138
  %v643 = vpop.f32.mrb[0].mxu0
  %v644 = vadd.f32 0.0, %v643
  %v645 = vpop.f32.mrb[0].mxu0
  %v646 = vpop.f32.mrb[0].mxu0
  %v647 = vadd.f32 0.0, %v646
  %v648 = vpop.f32.mrb[0].mxu0
  %649 = vmatprep.mubr.bf16.mxu0 0
  %650 = vmatmul.mubr.bf16.gmra.mrb[0].mxu0 %v139
  %v651 = vpop.f32.mrb[0].mxu0
  %v652 = vadd.f32 0.0, %v651
  %v653 = vpop.f32.mrb[0].mxu0
  %v654 = vpop.f32.mrb[0].mxu0
  %v655 = vadd.f32 0.0, %v654
  %v656 = vpop.f32.mrb[0].mxu0
  %657 = vmatprep.mubr.bf16.mxu0 0
  %658 = vmatmul.mubr.bf16.gmra.mrb[0].mxu0 %v140
  %v659 = vpop.f32.mrb[0].mxu0
  %v660 = vadd.f32 0.0, %v659
  %v661 = vpop.f32.mrb[0].mxu0
  %v662 = vpop.f32.mrb[0].mxu0
  %v663 = vadd.f32 0.0, %v662
  %v664 = vpop.f32.mrb[0].mxu0
  %665 = vmatprep.mubr.bf16.mxu0 0
  %666 = vmatmul.mubr.bf16.gmra.mrb[0].mxu0 %v141
  %v667 = vpop.f32.mrb[0].mxu0
  %v668 = vadd.f32 0.0, %v667
  %v669 = vpop.f32.mrb[0].mxu0
  %v670 = vpop.f32.mrb[0].mxu0
  %v671 = vadd.f32 0.0, %v670
  %v672 = vpop.f32.mrb[0].mxu0
  %673 = vmatprep.mubr.bf16.mxu0 0
  %674 = vmatmul.mubr.bf16.gmra.mrb[0].mxu0 %v142
  %v675 = vpop.f32.mrb[0].mxu0
  %v676 = vadd.f32 0.0, %v675
  %v677 = vpop.f32.mrb[0].mxu0
  %v678 = vpop.f32.mrb[0].mxu0
  %v679 = vadd.f32 0.0, %v678
  %v680 = vpop.f32.mrb[0].mxu0
  %681 = vmatprep.mubr.bf16.mxu0 0
  %682 = vmatmul.mubr.bf16.gmra.mrb[0].mxu0 %v143
  %v683 = vpop.f32.mrb[0].mxu0
  %v684 = vadd.f32 0.0, %v683
  %v685 = vpop.f32.mrb[0].mxu0
  %v686 = vpop.f32.mrb[0].mxu0
  %v687 = vadd.f32 0.0, %v686
  %v688 = vpop.f32.mrb[0].mxu0
  %689 = vdwg.mxu0
  %v690 = vmul.f32 %v628, %v300
  %v691 = vmul.f32 %v631, %v305
  %v692 = vmul.f32 %v636, %v310
  %v693 = vmul.f32 %v639, %v315
  %v694 = vmul.f32 %v644, %v320
  %v695 = vmul.f32 %v647, %v325
  %v696 = vmul.f32 %v652, %v330
  %v697 = vmul.f32 %v655, %v335
  %v698 = vmul.f32 %v660, %v340
  %v699 = vmul.f32 %v663, %v345
  %v700 = vmul.f32 %v668, %v350
  %v701 = vmul.f32 %v671, %v355
  %v702 = vmul.f32 %v676, %v360
  %v703 = vmul.f32 %v679, %v365
  %v704 = vmul.f32 %v684, %v370
  %v705 = vmul.f32 %v687, %v375
  %v706 = vpack.c.bf16 %v691, %v690
  %v707 = vpack.c.bf16 %v693, %v692
  %v708 = vpack.c.bf16 %v695, %v694
  %v709 = vpack.c.bf16 %v697, %v696
  %v710 = vpack.c.bf16 %v699, %v698
  %v711 = vpack.c.bf16 %v701, %v700
  %v712 = vpack.c.bf16 %v703, %v702
  %v713 = vpack.c.bf16 %v705, %v704
  %v715 = vlaneseq
  %v716 = vshrl.u32 %v715, 7
  %v717 = vsub.s32 0, %v716
  %v718 = vrot.slane %v592, %v717
  %v736 = vunpack.c.l.b16 %v576
  %v737 = vunpack.c.l.b16 %v577
  %v738 = vunpack.c.l.b16 %v578
  %v739 = vunpack.c.l.b16 %v579
  %v740 = vunpack.c.l.b16 %v580
  %v741 = vunpack.c.l.b16 %v581
  %v742 = vunpack.c.l.b16 %v582
  %v743 = vunpack.c.l.b16 %v583
  %v744 = vunpack.c.l.b16 %v584
  %v745 = vunpack.c.l.b16 %v585
  %v746 = vunpack.c.l.b16 %v586
  %v747 = vunpack.c.l.b16 %v587
  %v748 = vunpack.c.l.b16 %v588
  %v749 = vunpack.c.l.b16 %v589
  %v750 = vunpack.c.l.b16 %v590
  %v751 = vunpack.c.l.b16 %v591
  %v752 = vpack.c.b16 %v737, %v736
  %v753 = vpack.c.b16 %v739, %v738
  %v754 = vpack.c.b16 %v741, %v740
  %v755 = vpack.c.b16 %v743, %v742
  %v756 = vpack.c.b16 %v745, %v744
  %v757 = vpack.c.b16 %v747, %v746
  %v758 = vpack.c.b16 %v749, %v748
  %v759 = vpack.c.b16 %v751, %v750
  %768 = vmatprep.subr.bf16.mxu0 0
  %769 = vmatpush1.bf16.msra.mxu0 %v752
  %770 = vmatprep.subr.bf16.mxu0 0
  %771 = vmatpush1.bf16.msra.mxu0 %v753
  %772 = vmatprep.subr.bf16.mxu0 0
  %773 = vmatpush1.bf16.msra.mxu0 %v754
  %774 = vmatprep.subr.bf16.mxu0 0
  %775 = vmatpush1.bf16.msra.mxu0 %v755
  %776 = vmatprep.subr.bf16.mxu0 0
  %777 = vmatpush1.bf16.msra.mxu0 %v756
  %778 = vmatprep.subr.bf16.mxu0 0
  %779 = vmatpush1.bf16.msra.mxu0 %v757
  %780 = vmatprep.subr.bf16.mxu0 0
  %781 = vmatpush1.bf16.msra.mxu0 %v758
  %782 = vmatprep.subr.bf16.mxu0 0
  %783 = vmatpush1.bf16.msra.mxu0 %v759
  %784 = vmatprep.subr.bf16.mxu0 0
  %785 = vmatpush1.bf16.msra.mxu0 0
  %786 = vmatprep.subr.bf16.mxu0 0
  %787 = vmatpush1.bf16.msra.mxu0 0
  %788 = vmatprep.subr.bf16.mxu0 0
  %789 = vmatpush1.bf16.msra.mxu0 0
  %790 = vmatprep.subr.bf16.mxu0 0
  %791 = vmatpush1.bf16.msra.mxu0 0
  %792 = vmatprep.subr.bf16.mxu0 0
  %793 = vmatpush1.bf16.msra.mxu0 0
  %794 = vmatprep.subr.bf16.mxu0 0
  %795 = vmatpush1.bf16.msra.mxu0 0
  %796 = vmatprep.subr.bf16.mxu0 0
  %797 = vmatpush1.bf16.msra.mxu0 0
  %798 = vmatprep.subr.bf16.mxu0 0
  %799 = vmatpush1.bf16.msra.mxu0 0
  %800 = vmatprep.mubr.bf16.mxu0 0
  %801 = vmatmul.mubr.bf16.gmra.mrb[0].mxu0 %v706
  %v802 = vpop.f32.mrb[0].mxu0
  %v803 = vadd.f32 %v718, %v802
  %v804 = vpop.f32.mrb[0].mxu0
  %v805 = vpop.f32.mrb[0].mxu0
  %v806 = vadd.f32 %v718, %v805
  %v807 = vpop.f32.mrb[0].mxu0
  %808 = vmatprep.mubr.bf16.mxu0 0
  %809 = vmatmul.mubr.bf16.gmra.mrb[0].mxu0 %v707
  %v810 = vpop.f32.mrb[0].mxu0
  %v811 = vadd.f32 %v718, %v810
  %v812 = vpop.f32.mrb[0].mxu0
  %v813 = vpop.f32.mrb[0].mxu0
  %v814 = vadd.f32 %v718, %v813
  %v815 = vpop.f32.mrb[0].mxu0
  %816 = vmatprep.mubr.bf16.mxu0 0
  %817 = vmatmul.mubr.bf16.gmra.mrb[0].mxu0 %v708
  %v818 = vpop.f32.mrb[0].mxu0
  %v819 = vadd.f32 %v718, %v818
  %v820 = vpop.f32.mrb[0].mxu0
  %v821 = vpop.f32.mrb[0].mxu0
  %v822 = vadd.f32 %v718, %v821
  %v823 = vpop.f32.mrb[0].mxu0
  %824 = vmatprep.mubr.bf16.mxu0 0
  %825 = vmatmul.mubr.bf16.gmra.mrb[0].mxu0 %v709
  %v826 = vpop.f32.mrb[0].mxu0
  %v827 = vadd.f32 %v718, %v826
  %v828 = vpop.f32.mrb[0].mxu0
  %v829 = vpop.f32.mrb[0].mxu0
  %v830 = vadd.f32 %v718, %v829
  %v831 = vpop.f32.mrb[0].mxu0
  %832 = vmatprep.mubr.bf16.mxu0 0
  %833 = vmatmul.mubr.bf16.gmra.mrb[0].mxu0 %v710
  %v834 = vpop.f32.mrb[0].mxu0
  %v835 = vadd.f32 %v718, %v834
  %v836 = vpop.f32.mrb[0].mxu0
  %v837 = vpop.f32.mrb[0].mxu0
  %v838 = vadd.f32 %v718, %v837
  %v839 = vpop.f32.mrb[0].mxu0
  %840 = vmatprep.mubr.bf16.mxu0 0
  %841 = vmatmul.mubr.bf16.gmra.mrb[0].mxu0 %v711
  %v842 = vpop.f32.mrb[0].mxu0
  %v843 = vadd.f32 %v718, %v842
  %v844 = vpop.f32.mrb[0].mxu0
  %v845 = vpop.f32.mrb[0].mxu0
  %v846 = vadd.f32 %v718, %v845
  %v847 = vpop.f32.mrb[0].mxu0
  %848 = vmatprep.mubr.bf16.mxu0 0
  %849 = vmatmul.mubr.bf16.gmra.mrb[0].mxu0 %v712
  %v850 = vpop.f32.mrb[0].mxu0
  %v851 = vadd.f32 %v718, %v850
  %v852 = vpop.f32.mrb[0].mxu0
  %v853 = vpop.f32.mrb[0].mxu0
  %v854 = vadd.f32 %v718, %v853
  %v855 = vpop.f32.mrb[0].mxu0
  %856 = vmatprep.mubr.bf16.mxu0 0
  %857 = vmatmul.mubr.bf16.gmra.mrb[0].mxu0 %v713
  %v858 = vpop.f32.mrb[0].mxu0
  %v859 = vadd.f32 %v718, %v858
  %v860 = vpop.f32.mrb[0].mxu0
  %v861 = vpop.f32.mrb[0].mxu0
  %v862 = vadd.f32 %v718, %v861
  %v863 = vpop.f32.mrb[0].mxu0
  %864 = vdwg.mxu0
  %v865 = vtanh.pop %v803
  %v866 = vtanh.pop %v806
  %v867 = vtanh.pop %v811
  %v868 = vtanh.pop %v814
  %v869 = vtanh.pop %v819
  %v870 = vtanh.pop %v822
  %v871 = vtanh.pop %v827
  %v872 = vtanh.pop %v830
  %v873 = vtanh.pop %v835
  %v874 = vtanh.pop %v838
  %v875 = vtanh.pop %v843
  %v876 = vtanh.pop %v846
  %v877 = vtanh.pop %v851
  %v878 = vtanh.pop %v854
  %v879 = vtanh.pop %v859
  %v880 = vtanh.pop %v862
  %v881 = vpack.c.bf16 %v866, %v865
  %v882 = vpack.c.bf16 %v868, %v867
  %v883 = vpack.c.bf16 %v870, %v869
  %v884 = vpack.c.bf16 %v872, %v871
  %v885 = vpack.c.bf16 %v874, %v873
  %v886 = vpack.c.bf16 %v876, %v875
  %v887 = vpack.c.bf16 %v878, %v877
  %v888 = vpack.c.bf16 %v880, %v879
  %v889 = vld [vmem:[%s7] sm:$0xf]
  %v890 = vld [vmem:[%s7 + $0x4] sm:$0xf]
  %v891 = vld [vmem:[%s7 + $0x8] sm:$0xf]
  %v892 = vld [vmem:[%s7 + $0xc] sm:$0xf]
  %v893 = vld [vmem:[%s7 + $0x10] sm:$0xf]
  %v894 = vld [vmem:[%s7 + $0x14] sm:$0xf]
  %v895 = vld [vmem:[%s7 + $0x18] sm:$0xf]
  %v896 = vld [vmem:[%s7 + $0x1c] sm:$0xf]
  %v897 = vld [vmem:[%s7 + $0x20] sm:$0xf]
  %v898 = vld [vmem:[%s7 + $0x24] sm:$0xf]
  %v899 = vld [vmem:[%s7 + $0x28] sm:$0xf]
  %v900 = vld [vmem:[%s7 + $0x2c] sm:$0xf]
  %v901 = vld [vmem:[%s7 + $0x30] sm:$0xf]
  %v902 = vld [vmem:[%s7 + $0x34] sm:$0xf]
  %v903 = vld [vmem:[%s7 + $0x38] sm:$0xf]
  %v904 = vld [vmem:[%s7 + $0x3c] sm:$0xf]
  %v905 = vld [vmem:[%s8] sm:$0x1]
  %906 = vmatprep.subr.bf16.mxu0 0
  %907 = vmatpush1.bf16.msra.mxu0 %v881
  %908 = vmatprep.subr.bf16.mxu0 0
  %909 = vmatpush1.bf16.msra.mxu0 %v882
  %910 = vmatprep.subr.bf16.mxu0 0
  %911 = vmatpush1.bf16.msra.mxu0 %v883
  %912 = vmatprep.subr.bf16.mxu0 0
  %913 = vmatpush1.bf16.msra.mxu0 %v884
  %914 = vmatprep.subr.bf16.mxu0 0
  %915 = vmatpush1.bf16.msra.mxu0 %v885
  %916 = vmatprep.subr.bf16.mxu0 0
  %917 = vmatpush1.bf16.msra.mxu0 %v886
  %918 = vmatprep.subr.bf16.mxu0 0
  %919 = vmatpush1.bf16.msra.mxu0 %v887
  %920 = vmatprep.subr.bf16.mxu0 0
  %921 = vmatpush1.bf16.msra.mxu0 %v888
  %922 = vmatprep.subr.bf16.mxu0 0
  %923 = vmatpush1.bf16.msra.mxu0 0
  %924 = vmatprep.subr.bf16.mxu0 0
  %925 = vmatpush1.bf16.msra.mxu0 0
  %926 = vmatprep.subr.bf16.mxu0 0
  %927 = vmatpush1.bf16.msra.mxu0 0
  %928 = vmatprep.subr.bf16.mxu0 0
  %929 = vmatpush1.bf16.msra.mxu0 0
  %930 = vmatprep.subr.bf16.mxu0 0
  %931 = vmatpush1.bf16.msra.mxu0 0
  %932 = vmatprep.subr.bf16.mxu0 0
  %933 = vmatpush1.bf16.msra.mxu0 0
  %934 = vmatprep.subr.bf16.mxu0 0
  %935 = vmatpush1.bf16.msra.mxu0 0
  %936 = vmatprep.subr.bf16.mxu0 0
  %937 = vmatpush1.bf16.msra.mxu0 0
  %938 = vmatprep.mubr.bf16.mxu0 0
  %939 = vmatmul.mubr.bf16.gmra.mrb[0].mxu0 %v136
  %v940 = vpop.f32.mrb[0].mxu0
  %v941 = vadd.f32 0.0, %v940
  %v942 = vpop.f32.mrb[0].mxu0
  %v943 = vpop.f32.mrb[0].mxu0
  %v944 = vadd.f32 0.0, %v943
  %v945 = vpop.f32.mrb[0].mxu0
  %946 = vmatprep.mubr.bf16.mxu0 0
  %947 = vmatmul.mubr.bf16.gmra.mrb[0].mxu0 %v137
  %v948 = vpop.f32.mrb[0].mxu0
  %v949 = vadd.f32 0.0, %v948
  %v950 = vpop.f32.mrb[0].mxu0
  %v951 = vpop.f32.mrb[0].mxu0
  %v952 = vadd.f32 0.0, %v951
  %v953 = vpop.f32.mrb[0].mxu0
  %954 = vmatprep.mubr.bf16.mxu0 0
  %955 = vmatmul.mubr.bf16.gmra.mrb[0].mxu0 %v138
  %v956 = vpop.f32.mrb[0].mxu0
  %v957 = vadd.f32 0.0, %v956
  %v958 = vpop.f32.mrb[0].mxu0
  %v959 = vpop.f32.mrb[0].mxu0
  %v960 = vadd.f32 0.0, %v959
  %v961 = vpop.f32.mrb[0].mxu0
  %962 = vmatprep.mubr.bf16.mxu0 0
  %963 = vmatmul.mubr.bf16.gmra.mrb[0].mxu0 %v139
  %v964 = vpop.f32.mrb[0].mxu0
  %v965 = vadd.f32 0.0, %v964
  %v966 = vpop.f32.mrb[0].mxu0
  %v967 = vpop.f32.mrb[0].mxu0
  %v968 = vadd.f32 0.0, %v967
  %v969 = vpop.f32.mrb[0].mxu0
  %970 = vmatprep.mubr.bf16.mxu0 0
  %971 = vmatmul.mubr.bf16.gmra.mrb[0].mxu0 %v140
  %v972 = vpop.f32.mrb[0].mxu0
  %v973 = vadd.f32 0.0, %v972
  %v974 = vpop.f32.mrb[0].mxu0
  %v975 = vpop.f32.mrb[0].mxu0
  %v976 = vadd.f32 0.0, %v975
  %v977 = vpop.f32.mrb[0].mxu0
  %978 = vmatprep.mubr.bf16.mxu0 0
  %979 = vmatmul.mubr.bf16.gmra.mrb[0].mxu0 %v141
  %v980 = vpop.f32.mrb[0].mxu0
  %v981 = vadd.f32 0.0, %v980
  %v982 = vpop.f32.mrb[0].mxu0
  %v983 = vpop.f32.mrb[0].mxu0
  %v984 = vadd.f32 0.0, %v983
  %v985 = vpop.f32.mrb[0].mxu0
  %986 = vmatprep.mubr.bf16.mxu0 0
  %987 = vmatmul.mubr.bf16.gmra.mrb[0].mxu0 %v142
  %v988 = vpop.f32.mrb[0].mxu0
  %v989 = vadd.f32 0.0, %v988
  %v990 = vpop.f32.mrb[0].mxu0
  %v991 = vpop.f32.mrb[0].mxu0
  %v992 = vadd.f32 0.0, %v991
  %v993 = vpop.f32.mrb[0].mxu0
  %994 = vmatprep.mubr.bf16.mxu0 0
  %995 = vmatmul.mubr.bf16.gmra.mrb[0].mxu0 %v143
  %v996 = vpop.f32.mrb[0].mxu0
  %v997 = vadd.f32 0.0, %v996
  %v998 = vpop.f32.mrb[0].mxu0
  %v999 = vpop.f32.mrb[0].mxu0
  %v1000 = vadd.f32 0.0, %v999
  %v1001 = vpop.f32.mrb[0].mxu0
  %1002 = vdwg.mxu0
  %v1003 = vpack.c.bf16 %v944, %v941
  %v1004 = vpack.c.bf16 %v952, %v949
  %v1005 = vpack.c.bf16 %v960, %v957
  %v1006 = vpack.c.bf16 %v968, %v965
  %v1007 = vpack.c.bf16 %v976, %v973
  %v1008 = vpack.c.bf16 %v984, %v981
  %v1009 = vpack.c.bf16 %v992, %v989
  %v1010 = vpack.c.bf16 %v1000, %v997
  %v1012 = vlaneseq
  %v1013 = vshrl.u32 %v1012, 7
  %v1014 = vsub.s32 0, %v1013
  %v1015 = vrot.slane %v905, %v1014
  %v1033 = vunpack.c.l.b16 %v889
  %v1034 = vunpack.c.l.b16 %v890
  %v1035 = vunpack.c.l.b16 %v891
  %v1036 = vunpack.c.l.b16 %v892
  %v1037 = vunpack.c.l.b16 %v893
  %v1038 = vunpack.c.l.b16 %v894
  %v1039 = vunpack.c.l.b16 %v895
  %v1040 = vunpack.c.l.b16 %v896
  %v1041 = vunpack.c.l.b16 %v897
  %v1042 = vunpack.c.l.b16 %v898
  %v1043 = vunpack.c.l.b16 %v899
  %v1044 = vunpack.c.l.b16 %v900
  %v1045 = vunpack.c.l.b16 %v901
  %v1046 = vunpack.c.l.b16 %v902
  %v1047 = vunpack.c.l.b16 %v903
  %v1048 = vunpack.c.l.b16 %v904
  %v1049 = vpack.c.b16 %v1034, %v1033
  %v1050 = vpack.c.b16 %v1036, %v1035
  %v1051 = vpack.c.b16 %v1038, %v1037
  %v1052 = vpack.c.b16 %v1040, %v1039
  %v1053 = vpack.c.b16 %v1042, %v1041
  %v1054 = vpack.c.b16 %v1044, %v1043
  %v1055 = vpack.c.b16 %v1046, %v1045
  %v1056 = vpack.c.b16 %v1048, %v1047
  %1065 = vmatprep.subr.bf16.mxu0 0
  %1066 = vmatpush1.bf16.msra.mxu0 %v1049
  %1067 = vmatprep.subr.bf16.mxu0 0
  %1068 = vmatpush1.bf16.msra.mxu0 %v1050
  %1069 = vmatprep.subr.bf16.mxu0 0
  %1070 = vmatpush1.bf16.msra.mxu0 %v1051
  %1071 = vmatprep.subr.bf16.mxu0 0
  %1072 = vmatpush1.bf16.msra.mxu0 %v1052
  %1073 = vmatprep.subr.bf16.mxu0 0
  %1074 = vmatpush1.bf16.msra.mxu0 %v1053
  %1075 = vmatprep.subr.bf16.mxu0 0
  %1076 = vmatpush1.bf16.msra.mxu0 %v1054
  %1077 = vmatprep.subr.bf16.mxu0 0
  %1078 = vmatpush1.bf16.msra.mxu0 %v1055
  %1079 = vmatprep.subr.bf16.mxu0 0
  %1080 = vmatpush1.bf16.msra.mxu0 %v1056
  %1081 = vmatprep.subr.bf16.mxu0 0
  %1082 = vmatpush1.bf16.msra.mxu0 0
  %1083 = vmatprep.subr.bf16.mxu0 0
  %1084 = vmatpush1.bf16.msra.mxu0 0
  %1085 = vmatprep.subr.bf16.mxu0 0
  %1086 = vmatpush1.bf16.msra.mxu0 0
  %1087 = vmatprep.subr.bf16.mxu0 0
  %1088 = vmatpush1.bf16.msra.mxu0 0
  %1089 = vmatprep.subr.bf16.mxu0 0
  %1090 = vmatpush1.bf16.msra.mxu0 0
  %1091 = vmatprep.subr.bf16.mxu0 0
  %1092 = vmatpush1.bf16.msra.mxu0 0
  %1093 = vmatprep.subr.bf16.mxu0 0
  %1094 = vmatpush1.bf16.msra.mxu0 0
  %1095 = vmatprep.subr.bf16.mxu0 0
  %1096 = vmatpush1.bf16.msra.mxu0 0
  %1097 = vmatprep.mubr.bf16.mxu0 0
  %1098 = vmatmul.mubr.bf16.gmra.mrb[0].mxu0 %v1003
  %v1099 = vpop.f32.mrb[0].mxu0
  %v1100 = vadd.f32 %v1015, %v1099
  %v1101 = vpop.f32.mrb[0].mxu0
  %v1102 = vpop.f32.mrb[0].mxu0
  %v1103 = vadd.f32 %v1015, %v1102
  %v1104 = vpop.f32.mrb[0].mxu0
  %1105 = vmatprep.mubr.bf16.mxu0 0
  %1106 = vmatmul.mubr.bf16.gmra.mrb[0].mxu0 %v1004
  %v1107 = vpop.f32.mrb[0].mxu0
  %v1108 = vadd.f32 %v1015, %v1107
  %v1109 = vpop.f32.mrb[0].mxu0
  %v1110 = vpop.f32.mrb[0].mxu0
  %v1111 = vadd.f32 %v1015, %v1110
  %v1112 = vpop.f32.mrb[0].mxu0
  %1113 = vmatprep.mubr.bf16.mxu0 0
  %1114 = vmatmul.mubr.bf16.gmra.mrb[0].mxu0 %v1005
  %v1115 = vpop.f32.mrb[0].mxu0
  %v1116 = vadd.f32 %v1015, %v1115
  %v1117 = vpop.f32.mrb[0].mxu0
  %v1118 = vpop.f32.mrb[0].mxu0
  %v1119 = vadd.f32 %v1015, %v1118
  %v1120 = vpop.f32.mrb[0].mxu0
  %1121 = vmatprep.mubr.bf16.mxu0 0
  %1122 = vmatmul.mubr.bf16.gmra.mrb[0].mxu0 %v1006
  %v1123 = vpop.f32.mrb[0].mxu0
  %v1124 = vadd.f32 %v1015, %v1123
  %v1125 = vpop.f32.mrb[0].mxu0
  %v1126 = vpop.f32.mrb[0].mxu0
  %v1127 = vadd.f32 %v1015, %v1126
  %v1128 = vpop.f32.mrb[0].mxu0
  %1129 = vmatprep.mubr.bf16.mxu0 0
  %1130 = vmatmul.mubr.bf16.gmra.mrb[0].mxu0 %v1007
  %v1131 = vpop.f32.mrb[0].mxu0
  %v1132 = vadd.f32 %v1015, %v1131
  %v1133 = vpop.f32.mrb[0].mxu0
  %v1134 = vpop.f32.mrb[0].mxu0
  %v1135 = vadd.f32 %v1015, %v1134
  %v1136 = vpop.f32.mrb[0].mxu0
  %1137 = vmatprep.mubr.bf16.mxu0 0
  %1138 = vmatmul.mubr.bf16.gmra.mrb[0].mxu0 %v1008
  %v1139 = vpop.f32.mrb[0].mxu0
  %v1140 = vadd.f32 %v1015, %v1139
  %v1141 = vpop.f32.mrb[0].mxu0
  %v1142 = vpop.f32.mrb[0].mxu0
  %v1143 = vadd.f32 %v1015, %v1142
  %v1144 = vpop.f32.mrb[0].mxu0
  %1145 = vmatprep.mubr.bf16.mxu0 0
  %1146 = vmatmul.mubr.bf16.gmra.mrb[0].mxu0 %v1009
  %v1147 = vpop.f32.mrb[0].mxu0
  %v1148 = vadd.f32 %v1015, %v1147
  %v1149 = vpop.f32.mrb[0].mxu0
  %v1150 = vpop.f32.mrb[0].mxu0
  %v1151 = vadd.f32 %v1015, %v1150
  %v1152 = vpop.f32.mrb[0].mxu0
  %1153 = vmatprep.mubr.bf16.mxu0 0
  %1154 = vmatmul.mubr.bf16.gmra.mrb[0].mxu0 %v1010
  %v1155 = vpop.f32.mrb[0].mxu0
  %v1156 = vadd.f32 %v1015, %v1155
  %v1157 = vpop.f32.mrb[0].mxu0
  %v1158 = vpop.f32.mrb[0].mxu0
  %v1159 = vadd.f32 %v1015, %v1158
  %v1160 = vpop.f32.mrb[0].mxu0
  %1161 = vdwg.mxu0
  %v1162 = vtanh.pop %v1100
  %v1163 = vtanh.pop %v1103
  %v1164 = vtanh.pop %v1108
  %v1165 = vtanh.pop %v1111
  %v1166 = vtanh.pop %v1116
  %v1167 = vtanh.pop %v1119
  %v1168 = vtanh.pop %v1124
  %v1169 = vtanh.pop %v1127
  %v1170 = vtanh.pop %v1132
  %v1171 = vtanh.pop %v1135
  %v1172 = vtanh.pop %v1140
  %v1173 = vtanh.pop %v1143
  %v1174 = vtanh.pop %v1148
  %v1175 = vtanh.pop %v1151
  %v1176 = vtanh.pop %v1156
  %v1177 = vtanh.pop %v1159
  %v1178 = vpack.c.bf16 %v1163, %v1162
  %v1179 = vpack.c.bf16 %v1165, %v1164
  %v1180 = vpack.c.bf16 %v1167, %v1166
  %v1181 = vpack.c.bf16 %v1169, %v1168
  %v1182 = vpack.c.bf16 %v1171, %v1170
  %v1183 = vpack.c.bf16 %v1173, %v1172
  %v1184 = vpack.c.bf16 %v1175, %v1174
  %v1185 = vpack.c.bf16 %v1177, %v1176
  %v1186 = vld [vmem:[%s9] sm:$0xf]
  %v1187 = vld [vmem:[%s9 + $0x4] sm:$0xf]
  %v1188 = vld [vmem:[%s9 + $0x8] sm:$0xf]
  %v1189 = vld [vmem:[%s9 + $0xc] sm:$0xf]
  %v1190 = vld [vmem:[%s9 + $0x10] sm:$0xf]
  %v1191 = vld [vmem:[%s9 + $0x14] sm:$0xf]
  %v1192 = vld [vmem:[%s9 + $0x18] sm:$0xf]
  %v1193 = vld [vmem:[%s9 + $0x1c] sm:$0xf]
  %v1194 = vld [vmem:[%s9 + $0x20] sm:$0xf]
  %v1195 = vld [vmem:[%s9 + $0x24] sm:$0xf]
  %v1196 = vld [vmem:[%s9 + $0x28] sm:$0xf]
  %v1197 = vld [vmem:[%s9 + $0x2c] sm:$0xf]
  %v1198 = vld [vmem:[%s9 + $0x30] sm:$0xf]
  %v1199 = vld [vmem:[%s9 + $0x34] sm:$0xf]
  %v1200 = vld [vmem:[%s9 + $0x38] sm:$0xf]
  %v1201 = vld [vmem:[%s9 + $0x3c] sm:$0xf]
  %v1202 = vld [vmem:[%s10] sm:$0x1]
  %v1204 = vlaneseq
  %v1205 = vshrl.u32 %v1204, 7
  %v1206 = vsub.s32 0, %v1205
  %v1207 = vrot.slane %v1202, %v1206
  %v1225 = vunpack.c.l.b16 %v1186
  %v1226 = vunpack.c.l.b16 %v1187
  %v1227 = vunpack.c.l.b16 %v1188
  %v1228 = vunpack.c.l.b16 %v1189
  %v1229 = vunpack.c.l.b16 %v1190
  %v1230 = vunpack.c.l.b16 %v1191
  %v1231 = vunpack.c.l.b16 %v1192
  %v1232 = vunpack.c.l.b16 %v1193
  %v1233 = vunpack.c.l.b16 %v1194
  %v1234 = vunpack.c.l.b16 %v1195
  %v1235 = vunpack.c.l.b16 %v1196
  %v1236 = vunpack.c.l.b16 %v1197
  %v1237 = vunpack.c.l.b16 %v1198
  %v1238 = vunpack.c.l.b16 %v1199
  %v1239 = vunpack.c.l.b16 %v1200
  %v1240 = vunpack.c.l.b16 %v1201
  %v1241 = vpack.c.b16 %v1226, %v1225
  %v1242 = vpack.c.b16 %v1228, %v1227
  %v1243 = vpack.c.b16 %v1230, %v1229
  %v1244 = vpack.c.b16 %v1232, %v1231
  %v1245 = vpack.c.b16 %v1234, %v1233
  %v1246 = vpack.c.b16 %v1236, %v1235
  %v1247 = vpack.c.b16 %v1238, %v1237
  %v1248 = vpack.c.b16 %v1240, %v1239
  %1257 = vmatprep.subr.bf16.mxu0 0
  %1258 = vmatpush1.bf16.msra.mxu0 %v1241
  %1259 = vmatprep.subr.bf16.mxu0 0
  %1260 = vmatpush1.bf16.msra.mxu0 %v1242
  %1261 = vmatprep.subr.bf16.mxu0 0
  %1262 = vmatpush1.bf16.msra.mxu0 %v1243
  %1263 = vmatprep.subr.bf16.mxu0 0
  %1264 = vmatpush1.bf16.msra.mxu0 %v1244
  %1265 = vmatprep.subr.bf16.mxu0 0
  %1266 = vmatpush1.bf16.msra.mxu0 %v1245
  %1267 = vmatprep.subr.bf16.mxu0 0
  %1268 = vmatpush1.bf16.msra.mxu0 %v1246
  %1269 = vmatprep.subr.bf16.mxu0 0
  %1270 = vmatpush1.bf16.msra.mxu0 %v1247
  %1271 = vmatprep.subr.bf16.mxu0 0
  %1272 = vmatpush1.bf16.msra.mxu0 %v1248
  %1273 = vmatprep.subr.bf16.mxu0 0
  %1274 = vmatpush1.bf16.msra.mxu0 0
  %1275 = vmatprep.subr.bf16.mxu0 0
  %1276 = vmatpush1.bf16.msra.mxu0 0
  %1277 = vmatprep.subr.bf16.mxu0 0
  %1278 = vmatpush1.bf16.msra.mxu0 0
  %1279 = vmatprep.subr.bf16.mxu0 0
  %1280 = vmatpush1.bf16.msra.mxu0 0
  %1281 = vmatprep.subr.bf16.mxu0 0
  %1282 = vmatpush1.bf16.msra.mxu0 0
  %1283 = vmatprep.subr.bf16.mxu0 0
  %1284 = vmatpush1.bf16.msra.mxu0 0
  %1285 = vmatprep.subr.bf16.mxu0 0
  %1286 = vmatpush1.bf16.msra.mxu0 0
  %1287 = vmatprep.subr.bf16.mxu0 0
  %1288 = vmatpush1.bf16.msra.mxu0 0
  %1289 = vmatprep.mubr.bf16.mxu0 0
  %1290 = vmatmul.mubr.bf16.gmra.mrb[0].mxu0 %v1178
  %v1291 = vpop.f32.mrb[0].mxu0
  %v1292 = vadd.f32 %v1207, %v1291
  %v1293 = vpop.f32.mrb[0].mxu0
  %v1294 = vpop.f32.mrb[0].mxu0
  %v1295 = vadd.f32 %v1207, %v1294
  %v1296 = vpop.f32.mrb[0].mxu0
  %1297 = vmatprep.mubr.bf16.mxu0 0
  %1298 = vmatmul.mubr.bf16.gmra.mrb[0].mxu0 %v1179
  %v1299 = vpop.f32.mrb[0].mxu0
  %v1300 = vadd.f32 %v1207, %v1299
  %v1301 = vpop.f32.mrb[0].mxu0
  %v1302 = vpop.f32.mrb[0].mxu0
  %v1303 = vadd.f32 %v1207, %v1302
  %v1304 = vpop.f32.mrb[0].mxu0
  %1305 = vmatprep.mubr.bf16.mxu0 0
  %1306 = vmatmul.mubr.bf16.gmra.mrb[0].mxu0 %v1180
  %v1307 = vpop.f32.mrb[0].mxu0
  %v1308 = vadd.f32 %v1207, %v1307
  %v1309 = vpop.f32.mrb[0].mxu0
  %v1310 = vpop.f32.mrb[0].mxu0
  %v1311 = vadd.f32 %v1207, %v1310
  %v1312 = vpop.f32.mrb[0].mxu0
  %1313 = vmatprep.mubr.bf16.mxu0 0
  %1314 = vmatmul.mubr.bf16.gmra.mrb[0].mxu0 %v1181
  %v1315 = vpop.f32.mrb[0].mxu0
  %v1316 = vadd.f32 %v1207, %v1315
  %v1317 = vpop.f32.mrb[0].mxu0
  %v1318 = vpop.f32.mrb[0].mxu0
  %v1319 = vadd.f32 %v1207, %v1318
  %v1320 = vpop.f32.mrb[0].mxu0
  %1321 = vmatprep.mubr.bf16.mxu0 0
  %1322 = vmatmul.mubr.bf16.gmra.mrb[0].mxu0 %v1182
  %v1323 = vpop.f32.mrb[0].mxu0
  %v1324 = vadd.f32 %v1207, %v1323
  %v1325 = vpop.f32.mrb[0].mxu0
  %v1326 = vpop.f32.mrb[0].mxu0
  %v1327 = vadd.f32 %v1207, %v1326
  %v1328 = vpop.f32.mrb[0].mxu0
  %1329 = vmatprep.mubr.bf16.mxu0 0
  %1330 = vmatmul.mubr.bf16.gmra.mrb[0].mxu0 %v1183
  %v1331 = vpop.f32.mrb[0].mxu0
  %v1332 = vadd.f32 %v1207, %v1331
  %v1333 = vpop.f32.mrb[0].mxu0
  %v1334 = vpop.f32.mrb[0].mxu0
  %v1335 = vadd.f32 %v1207, %v1334
  %v1336 = vpop.f32.mrb[0].mxu0
  %1337 = vmatprep.mubr.bf16.mxu0 0
  %1338 = vmatmul.mubr.bf16.gmra.mrb[0].mxu0 %v1184
  %v1339 = vpop.f32.mrb[0].mxu0
  %v1340 = vadd.f32 %v1207, %v1339
  %v1341 = vpop.f32.mrb[0].mxu0
  %v1342 = vpop.f32.mrb[0].mxu0
  %v1343 = vadd.f32 %v1207, %v1342
  %v1344 = vpop.f32.mrb[0].mxu0
  %1345 = vmatprep.mubr.bf16.mxu0 0
  %1346 = vmatmul.mubr.bf16.gmra.mrb[0].mxu0 %v1185
  %v1347 = vpop.f32.mrb[0].mxu0
  %v1348 = vadd.f32 %v1207, %v1347
  %v1349 = vpop.f32.mrb[0].mxu0
  %v1350 = vpop.f32.mrb[0].mxu0
  %v1351 = vadd.f32 %v1207, %v1350
  %v1352 = vpop.f32.mrb[0].mxu0
  %1353 = vdwg.mxu0
  %1354 = vst [vmem:[%s11] sm:$0xff] %v1292
  %1355 = vst [vmem:[%s11 + $0x8] sm:$0xff] %v1295
  %1356 = vst [vmem:[%s11 + $0x10] sm:$0xff] %v1300
  %1357 = vst [vmem:[%s11 + $0x18] sm:$0xff] %v1303
  %1358 = vst [vmem:[%s11 + $0x20] sm:$0xff] %v1308
  %1359 = vst [vmem:[%s11 + $0x28] sm:$0xff] %v1311
  %1360 = vst [vmem:[%s11 + $0x30] sm:$0xff] %v1316
  %1361 = vst [vmem:[%s11 + $0x38] sm:$0xff] %v1319
  %1362 = vst [vmem:[%s11 + $0x40] sm:$0xff] %v1324
  %1363 = vst [vmem:[%s11 + $0x48] sm:$0xff] %v1327
  %1364 = vst [vmem:[%s11 + $0x50] sm:$0xff] %v1332
  %1365 = vst [vmem:[%s11 + $0x58] sm:$0xff] %v1335
  %1366 = vst [vmem:[%s11 + $0x60] sm:$0xff] %v1340
  %1367 = vst [vmem:[%s11 + $0x68] sm:$0xff] %v1343
  %1368 = vst [vmem:[%s11 + $0x70] sm:$0xff] %v1348
  %1369 = vst [vmem:[%s11 + $0x78] sm:$0xff] %v1351
  // Predicated region
  $region46: #{gcn3_forward.1} parent=0 // pred_check
    _
  $region47: #{gcn3_forward.1} parent=0 // pred_check_branch
    %1371 = sbr.rel (0) target = $region49
  $region48: #{gcn3_forward.1} parent=0 // pred_region
    _
  $region49: #{gcn3_forward.1} parent=0 // pred_fallthru
    _
  // Predicated region
  $region50: #{gcn3_forward.1} parent=0 // pred_check
    _
  $region51: #{gcn3_forward.1} parent=0 // pred_check_branch
    %1373 = sbr.rel (0) target = $region53
  $region52: #{gcn3_forward.1} parent=0 // pred_region
    _
  $region53: #{gcn3_forward.1} parent=0 // pred_fallthru
    _

</llo_original>
